<compile_context>
chip_gen: v5e
topology: v5e:2x2
jax: 0.10.0
libtpu: 0.0.40
codegen_flags: <defaults>
</compile_context>

<pallas_src>
import functools
import math

import jax
import jax.numpy as jnp
import numpy as np
from jax.experimental import pallas as pl
from jax.experimental.pallas import tpu as pltpu


def _normalize_kernel(x_ref, z_ref, *, scale):
    # x_ref: (TR, D) f32; z_ref: (TR, D) bf16.
    # z = scale * x / max(||x||, 1e-12)  ==  x * (rsqrt(max(ss, 1e-24)) * scale)
    x = x_ref[...]
    ss = jnp.sum(x * x, axis=1, keepdims=True)
    inv = jax.lax.rsqrt(jnp.maximum(ss, jnp.float32(1e-24))) * jnp.float32(scale)
    z_ref[...] = (x * inv).astype(z_ref.dtype)


def _supcon_tile_kernel(zq_ref, zk_ref, w_ref, loss_ref,
                        m_acc, l_acc, a_acc, wsum_acc,
                        *, tq, tk, keys_resident):
    # zq_ref: (TQ, D) bf16 normalized query rows, pre-scaled by sqrt(1/tau)
    # zk_ref: (TK, D) bf16 key rows (or the full (B, D) array if resident)
    # w_ref : (TQ, TK) bf16 overlap weights (diagonal already zeroed on host)
    # loss_ref: (TQ, 1) f32 per-row loss (written on last k step)
    q = pl.program_id(0)
    k = pl.program_id(1)
    nk = pl.num_programs(1)

    @pl.when(k == 0)
    def _init():
        m_acc[...] = jnp.full_like(m_acc, -jnp.inf)
        l_acc[...] = jnp.zeros_like(l_acc)
        a_acc[...] = jnp.zeros_like(a_acc)
        wsum_acc[...] = jnp.zeros_like(wsum_acc)

    zq = zq_ref[...]
    if keys_resident:
        start = pl.multiple_of(k * tk, tk)
        zk = zk_ref[pl.ds(start, tk), :]
    else:
        zk = zk_ref[...]

    # s = (z_q @ z_k.T) / tau : bf16 MXU inputs, f32 accumulate; contraction on
    # dim 1 of BOTH operands avoids materializing a transpose through the XLU.
    s = jax.lax.dot_general(
        zq, zk,
        dimension_numbers=(((1,), (1,)), ((), ())),
        preferred_element_type=jnp.float32)

    # Weighted-logit sum and weight row-sum.  w's diagonal is already zero on
    # the host, so no masking is needed here and log_prob never materializes.
    w16 = w_ref[...]
    w = w16.astype(jnp.float32)
    a_acc[...] += jnp.sum(w * s, axis=1, keepdims=True)
    ones = jnp.ones((tk, 1), dtype=jnp.bfloat16)
    wsum_acc[...] += jax.lax.dot_general(
        w16, ones,
        dimension_numbers=(((1,), (0,)), ((), ())),
        preferred_element_type=jnp.float32)

    # Online logsumexp.  Only tiles that intersect the global diagonal pay for
    # the -1e9 mask; all other tiles take the unmasked path.
    diag_offset = k * tk - q * tq                       # row - col == diag_offset
    intersects = jnp.logical_and(diag_offset > -tk, diag_offset < tq)

    def _online_update(s_lse):
        m_prev = m_acc[...]
        m_new = jnp.maximum(m_prev, jnp.max(s_lse, axis=1, keepdims=True))
        l_acc[...] = (l_acc[...] * jnp.exp(m_prev - m_new)
                      + jnp.sum(jnp.exp(s_lse - m_new), axis=1, keepdims=True))
        m_acc[...] = m_new

    @pl.when(intersects)
    def _lse_masked():
        d = (jax.lax.broadcasted_iota(jnp.int32, (tq, tk), 0)
             - jax.lax.broadcasted_iota(jnp.int32, (tq, tk), 1))
        _online_update(jnp.where(d == diag_offset, jnp.float32(-1e9), s))

    @pl.when(jnp.logical_not(intersects))
    def _lse_unmasked():
        _online_update(s)

    @pl.when(k == nk - 1)
    def _finalize():
        lse = m_acc[...] + jnp.log(l_acc[...])
        loss_ref[...] = ((wsum_acc[...] * lse - a_acc[...])
                         / (wsum_acc[...] + jnp.float32(1e-8)))


def _pick_tile(n, candidates, min_programs=1):
    divisors = [c for c in candidates if n % c == 0]
    for c in divisors:
        if n // c >= min_programs:
            return c
    if divisors:
        return divisors[0]
    return n  # full extent (legal: block dim equal to the array dim)


def multilabel_supcon_loss(embeddings, w, temperature=0.05):
    """Forward of MultiLabelSupConLoss.

    embeddings: (B, D) float array.
    w: (B, B) Jaccard overlap weights with ZERO diagonal (as produced by
       `compute_overlap_weights_np`, matching the reference's masked_fill).
    """
    emb = jnp.asarray(embeddings, jnp.float32)
    w16 = jnp.asarray(w, jnp.bfloat16)          # stream w in bf16 (halved HBM traffic)
    B, D = emb.shape

    # VMEM budget: derive from the chip; leave headroom (v7x TC has only 64 MiB).
    try:
        vmem_cap = int(pltpu.get_tpu_info().vmem_capacity_bytes)
    except Exception:
        vmem_cap = 64 << 20                      # conservative (v7x per-TensorCore)
    vmem_budget = (vmem_cap * 3) // 4

    # Tile picks: q axis prefers >= 2 programs so both v7x TensorCores get work;
    # key axis prefers big tiles (fewer grid steps, fewer re-fetches).
    tq = _pick_tile(B, (512, 256, 128, 64, 32, 16, 8), min_programs=2)
    tk = _pick_tile(B, (2048, 1024, 512, 256, 128))

    # Keep all key rows resident in VMEM (DMA'd once) when they comfortably fit.
    keys_resident = (B > tk) and (2 * B * D * 2 <= vmem_budget // 3)

    # 1) L2-normalize rows once, emit bf16, fold sqrt(1/tau) so the bf16 MXU dot
    #    directly produces sim / tau.  Large row block: this kernel is HBM-bound.
    tr = _pick_tile(B, (2048, 1024, 512, 256, 128, 64, 32, 16, 8))
    scale = math.sqrt(1.0 / float(temperature))
    z = pl.pallas_call(
        functools.partial(_normalize_kernel, scale=scale),
        out_shape=jax.ShapeDtypeStruct((B, D), jnp.bfloat16),
        grid_spec=pltpu.PrefetchScalarGridSpec(
            num_scalar_prefetch=0,
            grid=(B // tr,),
            in_specs=[pl.BlockSpec((tr, D), lambda i: (i, 0))],
            out_specs=pl.BlockSpec((tr, D), lambda i: (i, 0))),
        compiler_params=pltpu.CompilerParams(
            dimension_semantics=("parallel",)),
    )(emb)

    # 2) Tiled online-softmax loss; per-row losses out, tiny mean done outside.
    lane = 128
    zq_bytes = 2 * tq * D * 2                                   # double-buffered bf16
    zk_rows = B if keys_resident else tk
    zk_bytes = 2 * zk_rows * D * 2
    w_bytes = 2 * tq * tk * 2
    out_bytes = 2 * tq * lane * 4                               # lane-padded (tq,1) f32
    scratch_bytes = 4 * tq * lane * 4                           # 4 lane-padded accumulators
    est = zq_bytes + zk_bytes + w_bytes + out_bytes + scratch_bytes
    vmem_limit = int(min(vmem_budget, max(32 << 20, 2 * est)))

    if keys_resident:
        zk_spec = pl.BlockSpec((B, D), lambda qi, ki: (0, 0))   # DMA'd once, stays resident
    else:
        zk_spec = pl.BlockSpec((tk, D), lambda qi, ki: (ki, 0))

    per_row = pl.pallas_call(
        functools.partial(_supcon_tile_kernel,
                          tq=tq, tk=tk, keys_resident=keys_resident),
        out_shape=jax.ShapeDtypeStruct((B, 1), jnp.float32),
        grid_spec=pltpu.PrefetchScalarGridSpec(
            num_scalar_prefetch=0,
            grid=(B // tq, B // tk),
            in_specs=[
                pl.BlockSpec((tq, D), lambda qi, ki: (qi, 0)),    # z (query rows)
                zk_spec,                                          # z (key rows)
                pl.BlockSpec((tq, tk), lambda qi, ki: (qi, ki)),  # w tile (bf16)
            ],
            out_specs=pl.BlockSpec((tq, 1), lambda qi, ki: (qi, 0)),
            scratch_shapes=[pltpu.VMEM((tq, 1), jnp.float32)] * 4),
        compiler_params=pltpu.CompilerParams(
            dimension_semantics=("parallel", "arbitrary"),
            vmem_limit_bytes=vmem_limit),
    )(z, z, w16)

    # Final O(B) reduction kept outside the kernel so the row-tile axis stays
    # embarrassingly parallel (v7x 2-TC split).
    return jnp.mean(per_row)


def compute_overlap_weights_np(batch_labels):
    """Host-side glue: Jaccard overlap between label sets.

    The diagonal is zeroed here (host already loops over the matrix), matching
    the `w.masked_fill(eye, 0)` of the PyTorch forward, so the kernel does not
    need an eye-mask for w.
    """
    # TODO(synk): List[List[str]] set algebra has no Pallas equivalent; it stays on host.
    B = len(batch_labels)
    sets = [set(l) for l in batch_labels]
    weights = np.zeros((B, B), dtype=np.float32)
    for i in range(B):
        for j in range(B):
            if i == j:
                continue
            inter = len(sets[i] & sets[j])
            union = len(sets[i] | sets[j])
            weights[i, j] = inter / union if union > 0 else 0.0
    return weights


def _reference_loss(embeddings, w, tau=0.05):
    """Pure-JAX f32 reference mirroring the PyTorch forward exactly."""
    emb = jnp.asarray(embeddings, jnp.float32)
    B = emb.shape[0]
    z = emb / jnp.maximum(jnp.linalg.norm(emb, axis=1, keepdims=True), 1e-12)
    sim = (z @ z.T) / tau
    logits = sim - jnp.max(sim, axis=1, keepdims=True)
    eye = jnp.eye(B, dtype=bool)
    logits_masked = jnp.where(eye, -1e9, logits)
    ww = jnp.where(eye, 0.0, jnp.asarray(w, jnp.float32))
    log_prob = jax.nn.log_softmax(logits_masked, axis=1)
    loss = -(ww * log_prob).sum(axis=1) / (ww.sum(axis=1) + 1e-8)
    return loss.mean()


if __name__ == "__main__":
    key = jax.random.PRNGKey(0)
    B, D = 8, 32  # small shapes consistent with (B, D) embeddings

    embeddings = jax.random.normal(key, (B, D), dtype=jnp.float32)

    # Deterministic synthetic multi-label sets (List[List[str]] of length B).
    label_pool = ["cat", "dog", "bird", "fish", "lion", "bear"]
    batch_labels = [
        [label_pool[(i + k) % len(label_pool)] for k in range((i % 3) + 1)]
        for i in range(B)
    ]
    w = jnp.asarray(compute_overlap_weights_np(batch_labels))

    loss = multilabel_supcon_loss(embeddings, w, temperature=0.05)
    loss = jax.block_until_ready(loss)

    ref = jax.block_until_ready(_reference_loss(embeddings, w, tau=0.05))
    # bf16 MXU operands + bf16 w stream: compare against the f32 reference with
    # tolerances sized for bf16 input rounding (per the perf review).
    assert np.allclose(np.asarray(loss), np.asarray(ref), rtol=3e-2, atol=3e-2), (
        loss, ref)

    print("KERNEL_OK")
</pallas_src>

<mosaic_0001>
module attributes {stable_mosaic.version = 11 : i64} {
  func.func @_normalize_kernel(%arg0: i32, %arg1: memref<8x32xf32, #tpu.memory_space<vmem>>, %arg2: memref<8x32xbf16, #tpu.memory_space<vmem>>) attributes {dimension_semantics = [#tpu.dimension_semantics<parallel>], iteration_bounds = array<i64: 1>, scalar_prefetch = 0 : i64, scratch_operands = 0 : i64, tpu.core_type = #tpu.core_type<tc>, window_params = [{transform_indices = @transform_0, window_bounds = array<i64: 8, 32>}, {transform_indices = @transform_1, window_bounds = array<i64: 8, 32>}]} {
    %c0 = arith.constant 0 : index
    %c0_0 = arith.constant 0 : index
    %0 = vector.load %arg1[%c0, %c0_0] : memref<8x32xf32, #tpu.memory_space<vmem>>, vector<8x32xf32>
    %1 = arith.mulf %0, %0 : vector<8x32xf32>
    %cst = arith.constant dense<0.000000e+00> : vector<8xf32>
    %2 = vector.multi_reduction <add>, %1, %cst [1] : vector<8x32xf32> to vector<8xf32>
    %3 = vector.shape_cast %2 : vector<8xf32> to vector<8x1xf32>
    %cst_1 = arith.constant 1.000000e-24 : f32
    %4 = vector.broadcast %cst_1 : f32 to vector<8x1xf32>
    %5 = arith.maximumf %3, %4 : vector<8x1xf32>
    %6 = math.rsqrt %5 : vector<8x1xf32>
    %cst_2 = arith.constant 4.47213602 : f32
    %7 = vector.broadcast %cst_2 : f32 to vector<8x1xf32>
    %8 = arith.mulf %6, %7 : vector<8x1xf32>
    %9 = vector.broadcast %8 : vector<8x1xf32> to vector<8x32xf32>
    %10 = arith.mulf %0, %9 : vector<8x32xf32>
    %11 = arith.truncf %10 : vector<8x32xf32> to vector<8x32xbf16>
    %c0_3 = arith.constant 0 : index
    %c0_4 = arith.constant 0 : index
    %12 = vector.load %arg2[%c0_3, %c0_4] : memref<8x32xbf16, #tpu.memory_space<vmem>>, vector<8x32xbf16>
    tpu.vector_store %arg2[%c0_3, %c0_4], %11 {strides = array<i32>} : memref<8x32xbf16, #tpu.memory_space<vmem>>, vector<8x32xbf16>,
    return
  }
  func.func @transform_0(%arg0: i32) -> (i32, i32) {
    %c0_i32 = arith.constant 0 : i32
    %c0_i32_0 = arith.constant 0 : i32
    return %arg0, %c0_i32 : i32, i32
  }
  func.func @transform_1(%arg0: i32) -> (i32, i32) {
    %c0_i32 = arith.constant 0 : i32
    %c0_i32_0 = arith.constant 0 : i32
    return %arg0, %c0_i32 : i32, i32
  }
}

</mosaic_0001>

<llo_original>
// kernel: tpu_custom_call.1
$region0: #{tpu_custom_call.1}
  #allocation0 [shape = 'u32[]', space=smem, size = 0x4, offset = 0x4, fixed_abs, tag = 'smem constant byte address 0x4 - core index']
  #allocation1 [shape = 'u32[72,128]{1,0:T(1,128)}', space=vmem, size = 0x9000, scoped, tag = 'internal scratch']
  %s0 = inlined_call_operand.hbm [shape: f32[8,32], index: 0, kind: input, shape index: {}]
  %s1 = inlined_call_operand.hbm [shape: bf16[8,32], index: 1, kind: output, shape index: {}]
  %s2 = sld [smem:[#allocation0]]
  $region18: #{tpu_custom_call.1} parent=0
    _
  %s4 = ssub.s32 1, %s2
  %s5 = scalar_select 0, %s4, %s2
  $region1: #{tpu_custom_call.1} parent=0
    #allocation2 [shape = 'u8[4096]{0}', space=vmem, size = 0x1000, scoped, tag = 'input window, operand 0, single buffered']
    #allocation3 [shape = 's32[1]{0}', space=sflag, size = 0x4, scoped, tag = 'scoped memory for tpu_custom_call.1']
    #allocation4 [shape = 's32[1]{0}', space=sflag, size = 0x4, scoped, tag = 'scoped memory for tpu_custom_call.1']
    #allocation5 [shape = 'u8[2048]{0}', space=vmem, size = 0x800, scoped, tag = 'output window, operand 0, single buffered']
    %6 = vsyncpa [#allocation3], 0
    %7 = vsyncpa [#allocation4], 0
    // Predicated region
    $region2: #{tpu_custom_call.1} parent=1 // pred_check
      _
    $region3: #{tpu_custom_call.1} parent=1 // pred_check_branch
      %9 = sbr.rel (0) target = $region5
    $region4: #{tpu_custom_call.1} parent=1 // pred_region
      %11 = vsyncadd [#allocation3], 0
      %s13 = sshll.u32 %s0, 4
      %s14 = int_to_ptr.hbm [resolvable:$true] %s13
      %s15 = sshll.u32 [#allocation2], 4
      %s16 = int_to_ptr.vmem [resolvable:$true] %s15
      %18 = dma.hbm_to_vmem [thread:$0]  %s14, 128, %s16, [#allocation3]
    $region5: #{tpu_custom_call.1} parent=1 // pred_fallthru
      _
    // Predicated region
    $region6: #{tpu_custom_call.1} parent=1 // pred_check
      _
    $region7: #{tpu_custom_call.1} parent=1 // pred_check_branch
      %20 = sbr.rel (0) target = $region9
    $region8: #{tpu_custom_call.1} parent=1 // pred_region
      %22 = dma.done [#allocation3], 128
    $region9: #{tpu_custom_call.1} parent=1 // pred_fallthru
      _
    %v23 = vld [vmem:[#allocation2] sm:$0xff]
    %v24 = vmul.f32 %v23, %v23
    %vm25 = vcmask 261120
    %v26 = vsel %vm25, %v24, 0.0
    %27 = vadd.xlane.f32.xlu0 %v26
    %v28 = vpop.xlane.xlu0 %27
    %v29 = vmax.f32 %v28, 1e-24
    %v30 = vrsqrt.pop %v29
    %v31 = vmul.f32 %v30, %v29
    %v32 = vmul.f32 %v31, %v30
    %v33 = vmul.f32 0.5, %v32
    %v34 = vsub.f32 1.5, %v33
    %v35 = vmul.f32 %v30, %v34
    %vm36 = vweird.f32 %v29
    %vm37 = vweird.f32 %v30
    %vm38 = vmor %vm36, %vm37
    %v39 = vsel %vm38, %v30, %v35
    %v40 = vmul.f32 %v39, 4.472136
    %v41 = vmul.f32 %v23, %v40
    %v42 = vpack.c.bf16 %v41, %v41
    %vm43 = vcmask 257024
    %44 = vst.msk [vmem:[#allocation5] sm:$0xf] %vm43, %v42
    // Predicated region
    $region10: #{tpu_custom_call.1} parent=1 // pred_check
      _
    $region11: #{tpu_custom_call.1} parent=1 // pred_check_branch
      %46 = sbr.rel (0) target = $region13
    $region12: #{tpu_custom_call.1} parent=1 // pred_region
      %48 = vsyncadd [#allocation4], 0
      %s50 = sshll.u32 [#allocation5], 4
      %s51 = int_to_ptr.vmem [resolvable:$true] %s50
      %s52 = sshll.u32 %s1, 4
      %s53 = int_to_ptr.hbm [resolvable:$true] %s52
      %55 = dma.vmem_to_hbm [thread:$0]  %s51, 64, %s53, [#allocation4]
    $region13: #{tpu_custom_call.1} parent=1 // pred_fallthru
      _
    // Predicated region
    $region14: #{tpu_custom_call.1} parent=1 // pred_check
      _
    $region15: #{tpu_custom_call.1} parent=1 // pred_check_branch
      %57 = sbr.rel (0) target = $region17
    $region16: #{tpu_custom_call.1} parent=1 // pred_region
      %59 = dma.done [#allocation4], 64
    $region17: #{tpu_custom_call.1} parent=1 // pred_fallthru
      _
    %60 = vsyncpa [#allocation3], 1
    %61 = vsyncpa [#allocation4], 1

</llo_original>
